<compile_context>
chip_gen: v7x
topology: tpu7x:2x2x1
jax: 0.10.0
libtpu: 0.0.40
codegen_flags: <defaults>
</compile_context>

<pallas_src>
import jax
import jax.numpy as jnp
from jax import lax
from jax.experimental import pallas as pl
from jax.experimental.pallas import tpu as pltpu

EPS_BN = 1e-5          # PyTorch BatchNorm1d default eps
EPS_NORM = 1e-12       # PyTorch F.normalize default eps
N_HEAD_FEATS = 11      # quaternion(4) + rgb(3) + opacity(1) + scales(3)
HEADS_PAD = 128        # pad packed head output to a lane-dense 128


# --------------------------------------------------------------------------- #
# Input preparation (DynamicMLP.initialize_input) -- plain JAX, tiny work.
# --------------------------------------------------------------------------- #
def positional_encoding_ns(x, cfg):
    scaled = 2.0 * jnp.pi * x
    freqs = 2.0 ** jnp.linspace(cfg['min_freq'], cfg['max_freq'], cfg['n_freq'])
    si = scaled[..., None] * freqs                       # [B, D, n_freq]
    si = si.reshape(si.shape[0], -1)                     # [B, D*n_freq]
    return jnp.sin(jnp.concatenate([si, si + jnp.pi / 2.0], axis=-1))


def initialize_input(x, cfg):
    x = (x - x.min()) / (x.max() - x.min())
    if not cfg['use_positional_encoding']:
        return x
    if cfg['input_encoding'] != 'positional':
        raise NotImplementedError("only 'positional' encoding implemented")
    enc = positional_encoding_ns(x, cfg)
    if cfg['include_input']:
        return jnp.concatenate([x, enc], axis=1)
    return enc


def effective_input_dim(cfg):
    d = cfg['input_dim']
    if not cfg['use_positional_encoding']:
        return d
    enc = d * cfg['n_freq'] * 2
    return enc + d if cfg['include_input'] else enc


def layer_dims(cfg, d_in_eff):
    """(in_features, out_features) of every LinearBatchNormReLU layer."""
    n = cfg['num_layers']
    shared = cfg['shared_hidden_dim']
    hidden = cfg['hidden_dim']
    skips = set(cfg['skip_connections'])
    if n == 1:
        return [(d_in_eff, hidden)]
    dims = []
    for i in range(n - 1):
        if i == 0:
            dims.append((d_in_eff, shared))
        elif i in skips:
            dims.append((shared + d_in_eff, shared))
        else:
            dims.append((shared, shared))
    dims.append((shared, hidden))
    return dims


# --------------------------------------------------------------------------- #
# Fused Pallas kernel: packed input projection + trunk + packed heads.
# --------------------------------------------------------------------------- #
def make_mlp_kernel(dims, skip_set, proj_offsets, compute_dtype):
    num_layers = len(dims)
    skip_set = frozenset(skip_set)

    def kernel(*refs):
        # ---- parse the flat ref list ---------------------------------------
        idx = 0
        in_ref = refs[idx]; idx += 1
        winproj_ref = refs[idx]; idx += 1
        hid_w_refs = []
        for _ in range(1, num_layers):
            hid_w_refs.append(refs[idx]); idx += 1
        gb_ref = refs[idx]; idx += 1
        wheads_ref = refs[idx]; idx += 1
        out_ref = refs[idx]

        B = in_ref.shape[0]
        inv_B = 1.0 / B

        # One up-front matmul covers layer 0 and every skip layer's W_in block.
        in_proj = jnp.dot(in_ref[...], winproj_ref[...],
                          preferred_element_type=jnp.float32)   # [B, total_proj]
        gb = gb_ref[...]                                         # [2L+1, pad_w]

        # ---- MLP trunk -------------------------------------------------------
        x = None
        for i, (_din, dout) in enumerate(dims):
            if i == 0:
                off, w = proj_offsets[0]
                y = in_proj[:, off:off + w]
            elif i in skip_set:
                off, w = proj_offsets[i]
                # cat(in_tensor, x) @ W  ==  in_tensor@W_in (hoisted) + x@W_h
                y = in_proj[:, off:off + w] + jnp.dot(
                    x.astype(compute_dtype), hid_w_refs[i - 1][...],
                    preferred_element_type=jnp.float32)
            else:
                y = jnp.dot(x.astype(compute_dtype), hid_w_refs[i - 1][...],
                            preferred_element_type=jnp.float32)
            # One-pass training-mode BN batch stats.  Linear bias omitted:
            # the batch-mean subtraction cancels it exactly (training-mode only).
            mean = jnp.sum(y, axis=0, keepdims=True) * inv_B          # [1, dout]
            ey2 = jnp.sum(y * y, axis=0, keepdims=True) * inv_B       # [1, dout]
            var = jnp.maximum(ey2 - mean * mean, 0.0)                 # guard cancellation
            gamma = gb[2 * i:2 * i + 1, :dout]
            beta = gb[2 * i + 1:2 * i + 2, :dout]
            scale = gamma * lax.rsqrt(var + EPS_BN)                   # gamma folded in
            shift = beta - mean * scale
            x = jnp.maximum(y * scale + shift, 0.0)                   # FMA + ReLU

        # ---- packed heads: one lane-dense [B, 128] matmul --------------------
        h = jnp.dot(x.astype(compute_dtype), wheads_ref[...],
                    preferred_element_type=jnp.float32) \
            + gb[2 * num_layers:2 * num_layers + 1, :HEADS_PAD]
        lane = lax.broadcasted_iota(jnp.int32, h.shape, 1)
        q_mask = lane < 4                                             # quaternion lanes
        q_sq = jnp.where(q_mask, h * h, 0.0)
        q_ss = jnp.sum(q_sq, axis=-1, keepdims=True)                  # [B, 1]
        # F.normalize: q / max(||q||, eps)  ==  q * rsqrt(max(||q||^2, eps^2))
        q_out = h * lax.rsqrt(jnp.maximum(q_ss, EPS_NORM * EPS_NORM))
        # Sigmoid heads: exp (EUP) + approx reciprocal (EUP) + one Newton step.
        d = 1.0 + jnp.exp(-h)
        r = pl.reciprocal(d, approx=True)
        r = r * (2.0 - d * r)                                         # refine to ~f32
        out_ref[...] = jnp.where(q_mask, q_out, r).astype(out_ref.dtype)

    return kernel


# --------------------------------------------------------------------------- #
# Wrapper: packs kernel inputs, calls pallas_call, slices head outputs.
# --------------------------------------------------------------------------- #
def dynamic_mlp_forward(x, params, cfg, compute_dtype=jnp.float32):
    # compute_dtype=jnp.bfloat16 is the production large-B setting (bf16-native
    # MXU on v5e/v6e/v7x, halves weight/activation DMA); f32 kept here so the
    # tiny-shape 1e-4 reference check is exact.
    in_tensor = initialize_input(x, cfg)
    B, d_in_eff = in_tensor.shape
    hidden = cfg['hidden_dim']
    num_layers = cfg['num_layers']
    skips = set(cfg['skip_connections'])
    dims = layer_dims(cfg, d_in_eff)

    # ---- packed input-projection weights (layer 0 + every skip layer's W_in) --
    proj_blocks, proj_offsets, off = [], {}, 0
    for i, ((W, _b, _g, _bt), (_din, dout)) in enumerate(zip(params['layers'], dims)):
        if i == 0:
            proj_blocks.append(W.T)                      # [d_in_eff, dout]
            proj_offsets[0] = (0, dout)
            off += dout
        elif i in skips:
            proj_blocks.append(W[:, :d_in_eff].T)        # [d_in_eff, dout]
            proj_offsets[i] = (off, dout)
            off += dout
    w_inproj = jnp.concatenate(proj_blocks, axis=1)      # [d_in_eff, total_proj]

    # ---- per-layer hidden-path weights (layers 1 .. L-1) ----------------------
    hidden_ws = []
    for i, (W, _b, _g, _bt) in enumerate(params['layers']):
        if i == 0:
            continue
        hidden_ws.append(W[:, d_in_eff:].T if i in skips else W.T)

    # ---- single packed gamma/beta/head-bias array (one DMA) -------------------
    pad_w = max([HEADS_PAD] + [dout for _d, dout in dims])
    pad_w = ((pad_w + 127) // 128) * 128
    wq, bq = params['quaternion_head']
    wr, br = params['rgb_head']
    wo, bo = params['opacity_head']
    ws, bs = params['scales_head']
    rows = []
    for (_W, _b, gamma, beta), (_din, dout) in zip(params['layers'], dims):
        rows.append(jnp.pad(gamma, (0, pad_w - dout)))
        rows.append(jnp.pad(beta, (0, pad_w - dout)))
    b_heads = jnp.concatenate([bq, br, bo, bs])                       # [11]
    rows.append(jnp.pad(b_heads, (0, pad_w - N_HEAD_FEATS)))
    gb_packed = jnp.stack(rows, axis=0).astype(jnp.float32)           # [2L+1, pad_w]

    # ---- packed, lane-dense head weights --------------------------------------
    w_heads = jnp.concatenate([wq.T, wr.T, wo.T, ws.T], axis=1)       # [hidden, 11]
    w_heads = jnp.pad(w_heads, ((0, 0), (0, HEADS_PAD - N_HEAD_FEATS)))

    cd = compute_dtype
    kernel_inputs = ([in_tensor.astype(cd), w_inproj.astype(cd)]
                     + [w.astype(cd) for w in hidden_ws]
                     + [gb_packed, w_heads.astype(cd)])

    def full_spec(shape):
        zeros = (0,) * len(shape)
        return pl.BlockSpec(shape, lambda z=zeros: z)

    mats = [w_inproj] + hidden_ws + [w_heads]
    flops = sum(2 * B * m.shape[0] * m.shape[1] for m in mats)
    transcendentals = 2 * B * HEADS_PAD + sum(dout for _d, dout in dims) + B
    bytes_accessed = (sum(int(a.size) * a.dtype.itemsize for a in kernel_inputs)
                      + B * HEADS_PAD * 4)

    out = pl.pallas_call(
        make_mlp_kernel(dims, skips, proj_offsets, cd),
        out_shape=jax.ShapeDtypeStruct((B, HEADS_PAD), jnp.float32),
        grid=(),
        in_specs=[full_spec(a.shape) for a in kernel_inputs],
        out_specs=full_spec((B, HEADS_PAD)),
        cost_estimate=pl.CostEstimate(flops=flops,
                                      transcendentals=transcendentals,
                                      bytes_accessed=bytes_accessed),
    )(*kernel_inputs)

    # Slice the padded lane-dense output once, then split the small [B, 11].
    out11 = out[:, :N_HEAD_FEATS]
    quaternions = out11[:, 0:4]
    rgbs = out11[:, 4:7]
    opacities = out11[:, 7:8]
    scales = out11[:, 8:11]
    return quaternions, rgbs, opacities, scales


# --------------------------------------------------------------------------- #
# Pure-JAX reference (mirrors the PyTorch module, Linear bias included).
# --------------------------------------------------------------------------- #
def reference_forward(x, params, cfg):
    skips = set(cfg['skip_connections'])
    in_tensor = initialize_input(x, cfg)
    h = in_tensor
    for i, (W, b, gamma, beta) in enumerate(params['layers']):
        if i in skips:
            h = jnp.concatenate([in_tensor, h], axis=-1)
        y = h @ W.T + b
        mean = y.mean(axis=0, keepdims=True)
        var = ((y - mean) ** 2).mean(axis=0, keepdims=True)
        y = (y - mean) / jnp.sqrt(var + EPS_BN)
        h = jnp.maximum(gamma * y + beta, 0.0)

    def lin(p):
        W, b = p
        return h @ W.T + b

    sig = lambda z: 1.0 / (1.0 + jnp.exp(-z))
    q = lin(params['quaternion_head'])
    q = q / jnp.maximum(jnp.linalg.norm(q, axis=1, keepdims=True), EPS_NORM)
    return (q,
            sig(lin(params['rgb_head'])),
            sig(lin(params['opacity_head'])),
            sig(lin(params['scales_head'])))


# --------------------------------------------------------------------------- #
# Deterministic parameter construction.
# --------------------------------------------------------------------------- #
def init_params(key, cfg, d_in_eff):
    dims = layer_dims(cfg, d_in_eff)
    hidden = cfg['hidden_dim']
    keys = jax.random.split(key, len(dims) * 4 + 8)
    ki = iter(keys)
    params = {'layers': []}
    for (din, dout) in dims:
        W = jax.random.normal(next(ki), (dout, din), jnp.float32) * (2.0 / din) ** 0.5
        b = 0.1 * jax.random.normal(next(ki), (dout,), jnp.float32)   # nonzero: exercised
        gamma = 1.0 + 0.1 * jax.random.normal(next(ki), (dout,), jnp.float32)
        beta = 0.1 * jax.random.normal(next(ki), (dout,), jnp.float32)
        params['layers'].append((W, b, gamma, beta))

    def head(k, dout):
        k1, k2 = jax.random.split(k)
        W = jax.random.normal(k1, (dout, hidden), jnp.float32) * (1.0 / hidden) ** 0.5
        b = 0.1 * jax.random.normal(k2, (dout,), jnp.float32)
        return W, b

    params['quaternion_head'] = head(next(ki), 4)
    params['rgb_head'] = head(next(ki), 3)
    params['opacity_head'] = head(next(ki), 1)
    params['scales_head'] = head(next(ki), 3)
    return params


if __name__ == "__main__":
    config = {
        'input_dim': 3,
        'include_input': True,
        'use_positional_encoding': True,
        'input_encoding': 'positional',
        'n_freq': 4,
        'min_freq': 0.0,
        'max_freq': 3.0,
        'num_layers': 3,
        'shared_hidden_dim': 128,   # lane-dense hidden width
        'hidden_dim': 128,
        'skip_connections': [1],
    }
    B = 64

    key = jax.random.PRNGKey(0)
    k_x, k_p = jax.random.split(key)
    x = jax.random.normal(k_x, (B, config['input_dim']), dtype=jnp.float32)

    d_in_eff = effective_input_dim(config)           # 3*4*2 + 3 = 27
    params = init_params(k_p, config, d_in_eff)

    outs = dynamic_mlp_forward(x, params, config)
    outs = jax.block_until_ready(outs)
    refs = reference_forward(x, params, config)

    names = ('quaternions', 'rgbs', 'opacities', 'scales')
    shapes = ((B, 4), (B, 3), (B, 1), (B, 3))
    for name, shp, o, r in zip(names, shapes, outs, refs):
        assert o.shape == shp, f"{name}: bad shape {o.shape}"
        assert jnp.allclose(o, r, atol=1e-4, rtol=1e-4), f"{name}: mismatch vs reference"

    print("KERNEL_OK")
</pallas_src>

<mosaic_0001>
module attributes {stable_mosaic.version = 11 : i64} {
  func.func @kernel(%arg0: memref<64x27xf32, #tpu.memory_space<vmem>>, %arg1: memref<27x256xf32, #tpu.memory_space<vmem>>, %arg2: memref<128x128xf32, #tpu.memory_space<vmem>>, %arg3: memref<128x128xf32, #tpu.memory_space<vmem>>, %arg4: memref<7x128xf32, #tpu.memory_space<vmem>>, %arg5: memref<128x128xf32, #tpu.memory_space<vmem>>, %arg6: memref<64x128xf32, #tpu.memory_space<vmem>>) attributes {dimension_semantics = [], scalar_prefetch = 0 : i64, scratch_operands = 0 : i64, tpu.core_type = #tpu.core_type<tc>} {
    %c0 = arith.constant 0 : index
    %c0_0 = arith.constant 0 : index
    %0 = vector.load %arg0[%c0, %c0_0] : memref<64x27xf32, #tpu.memory_space<vmem>>, vector<64x27xf32>
    %c0_1 = arith.constant 0 : index
    %c0_2 = arith.constant 0 : index
    %1 = vector.load %arg1[%c0_1, %c0_2] : memref<27x256xf32, #tpu.memory_space<vmem>>, vector<27x256xf32>
    %cst = arith.constant dense<0.000000e+00> : vector<64x256xf32>
    %2 = tpu.matmul %0, %1, %cst {dimension_numbers = #tpu.dot_dimension_numbers<[1], [0], [0], [1], [0, 0, 1, 1], [], []>} : vector<64x27xf32>, vector<27x256xf32>, vector<64x256xf32> -> vector<64x256xf32>
    %c0_3 = arith.constant 0 : index
    %c0_4 = arith.constant 0 : index
    %3 = vector.load %arg4[%c0_3, %c0_4] : memref<7x128xf32, #tpu.memory_space<vmem>>, vector<7x128xf32>
    %4 = vector.extract_strided_slice %2 {offsets = [0, 0], sizes = [64, 128], strides = [1, 1]} : vector<64x256xf32> to vector<64x128xf32>
    %cst_5 = arith.constant dense<0.000000e+00> : vector<128xf32>
    %5 = vector.multi_reduction <add>, %4, %cst_5 [0] : vector<64x128xf32> to vector<128xf32>
    %6 = vector.shape_cast %5 : vector<128xf32> to vector<1x128xf32>
    %cst_6 = arith.constant 1.562500e-02 : f32
    %7 = vector.broadcast %cst_6 : f32 to vector<1x128xf32>
    %8 = arith.mulf %6, %7 : vector<1x128xf32>
    %9 = arith.mulf %4, %4 : vector<64x128xf32>
    %cst_7 = arith.constant dense<0.000000e+00> : vector<128xf32>
    %10 = vector.multi_reduction <add>, %9, %cst_7 [0] : vector<64x128xf32> to vector<128xf32>
    %11 = vector.shape_cast %10 : vector<128xf32> to vector<1x128xf32>
    %cst_8 = arith.constant 1.562500e-02 : f32
    %12 = vector.broadcast %cst_8 : f32 to vector<1x128xf32>
    %13 = arith.mulf %11, %12 : vector<1x128xf32>
    %14 = arith.mulf %8, %8 : vector<1x128xf32>
    %15 = arith.subf %13, %14 : vector<1x128xf32>
    %cst_9 = arith.constant 0.000000e+00 : f32
    %16 = vector.broadcast %cst_9 : f32 to vector<1x128xf32>
    %17 = arith.maximumf %15, %16 : vector<1x128xf32>
    %18 = vector.extract_strided_slice %3 {offsets = [0, 0], sizes = [1, 128], strides = [1, 1]} : vector<7x128xf32> to vector<1x128xf32>
    %19 = vector.extract_strided_slice %3 {offsets = [1, 0], sizes = [1, 128], strides = [1, 1]} : vector<7x128xf32> to vector<1x128xf32>
    %cst_10 = arith.constant 9.99999974E-6 : f32
    %20 = vector.broadcast %cst_10 : f32 to vector<1x128xf32>
    %21 = arith.addf %17, %20 : vector<1x128xf32>
    %22 = math.rsqrt %21 : vector<1x128xf32>
    %23 = arith.mulf %18, %22 : vector<1x128xf32>
    %24 = arith.mulf %8, %23 : vector<1x128xf32>
    %25 = arith.subf %19, %24 : vector<1x128xf32>
    %26 = vector.broadcast %23 : vector<1x128xf32> to vector<64x128xf32>
    %27 = arith.mulf %4, %26 : vector<64x128xf32>
    %28 = vector.broadcast %25 : vector<1x128xf32> to vector<64x128xf32>
    %29 = arith.addf %27, %28 : vector<64x128xf32>
    %cst_11 = arith.constant 0.000000e+00 : f32
    %30 = vector.broadcast %cst_11 : f32 to vector<64x128xf32>
    %31 = arith.maximumf %29, %30 : vector<64x128xf32>
    %32 = vector.extract_strided_slice %2 {offsets = [0, 128], sizes = [64, 128], strides = [1, 1]} : vector<64x256xf32> to vector<64x128xf32>
    %c0_12 = arith.constant 0 : index
    %c0_13 = arith.constant 0 : index
    %33 = vector.load %arg2[%c0_12, %c0_13] : memref<128x128xf32, #tpu.memory_space<vmem>>, vector<128x128xf32>
    %cst_14 = arith.constant dense<0.000000e+00> : vector<64x128xf32>
    %34 = tpu.matmul %31, %33, %cst_14 {dimension_numbers = #tpu.dot_dimension_numbers<[1], [0], [0], [1], [0, 0, 1, 1], [], []>} : vector<64x128xf32>, vector<128x128xf32>, vector<64x128xf32> -> vector<64x128xf32>
    %35 = arith.addf %32, %34 : vector<64x128xf32>
    %cst_15 = arith.constant dense<0.000000e+00> : vector<128xf32>
    %36 = vector.multi_reduction <add>, %35, %cst_15 [0] : vector<64x128xf32> to vector<128xf32>
    %37 = vector.shape_cast %36 : vector<128xf32> to vector<1x128xf32>
    %cst_16 = arith.constant 1.562500e-02 : f32
    %38 = vector.broadcast %cst_16 : f32 to vector<1x128xf32>
    %39 = arith.mulf %37, %38 : vector<1x128xf32>
    %40 = arith.mulf %35, %35 : vector<64x128xf32>
    %cst_17 = arith.constant dense<0.000000e+00> : vector<128xf32>
    %41 = vector.multi_reduction <add>, %40, %cst_17 [0] : vector<64x128xf32> to vector<128xf32>
    %42 = vector.shape_cast %41 : vector<128xf32> to vector<1x128xf32>
    %cst_18 = arith.constant 1.562500e-02 : f32
    %43 = vector.broadcast %cst_18 : f32 to vector<1x128xf32>
    %44 = arith.mulf %42, %43 : vector<1x128xf32>
    %45 = arith.mulf %39, %39 : vector<1x128xf32>
    %46 = arith.subf %44, %45 : vector<1x128xf32>
    %cst_19 = arith.constant 0.000000e+00 : f32
    %47 = vector.broadcast %cst_19 : f32 to vector<1x128xf32>
    %48 = arith.maximumf %46, %47 : vector<1x128xf32>
    %49 = vector.extract_strided_slice %3 {offsets = [2, 0], sizes = [1, 128], strides = [1, 1]} : vector<7x128xf32> to vector<1x128xf32>
    %50 = vector.extract_strided_slice %3 {offsets = [3, 0], sizes = [1, 128], strides = [1, 1]} : vector<7x128xf32> to vector<1x128xf32>
    %cst_20 = arith.constant 9.99999974E-6 : f32
    %51 = vector.broadcast %cst_20 : f32 to vector<1x128xf32>
    %52 = arith.addf %48, %51 : vector<1x128xf32>
    %53 = math.rsqrt %52 : vector<1x128xf32>
    %54 = arith.mulf %49, %53 : vector<1x128xf32>
    %55 = arith.mulf %39, %54 : vector<1x128xf32>
    %56 = arith.subf %50, %55 : vector<1x128xf32>
    %57 = vector.broadcast %54 : vector<1x128xf32> to vector<64x128xf32>
    %58 = arith.mulf %35, %57 : vector<64x128xf32>
    %59 = vector.broadcast %56 : vector<1x128xf32> to vector<64x128xf32>
    %60 = arith.addf %58, %59 : vector<64x128xf32>
    %cst_21 = arith.constant 0.000000e+00 : f32
    %61 = vector.broadcast %cst_21 : f32 to vector<64x128xf32>
    %62 = arith.maximumf %60, %61 : vector<64x128xf32>
    %c0_22 = arith.constant 0 : index
    %c0_23 = arith.constant 0 : index
    %63 = vector.load %arg3[%c0_22, %c0_23] : memref<128x128xf32, #tpu.memory_space<vmem>>, vector<128x128xf32>
    %cst_24 = arith.constant dense<0.000000e+00> : vector<64x128xf32>
    %64 = tpu.matmul %62, %63, %cst_24 {dimension_numbers = #tpu.dot_dimension_numbers<[1], [0], [0], [1], [0, 0, 1, 1], [], []>} : vector<64x128xf32>, vector<128x128xf32>, vector<64x128xf32> -> vector<64x128xf32>
    %cst_25 = arith.constant dense<0.000000e+00> : vector<128xf32>
    %65 = vector.multi_reduction <add>, %64, %cst_25 [0] : vector<64x128xf32> to vector<128xf32>
    %66 = vector.shape_cast %65 : vector<128xf32> to vector<1x128xf32>
    %cst_26 = arith.constant 1.562500e-02 : f32
    %67 = vector.broadcast %cst_26 : f32 to vector<1x128xf32>
    %68 = arith.mulf %66, %67 : vector<1x128xf32>
    %69 = arith.mulf %64, %64 : vector<64x128xf32>
    %cst_27 = arith.constant dense<0.000000e+00> : vector<128xf32>
    %70 = vector.multi_reduction <add>, %69, %cst_27 [0] : vector<64x128xf32> to vector<128xf32>
    %71 = vector.shape_cast %70 : vector<128xf32> to vector<1x128xf32>
    %cst_28 = arith.constant 1.562500e-02 : f32
    %72 = vector.broadcast %cst_28 : f32 to vector<1x128xf32>
    %73 = arith.mulf %71, %72 : vector<1x128xf32>
    %74 = arith.mulf %68, %68 : vector<1x128xf32>
    %75 = arith.subf %73, %74 : vector<1x128xf32>
    %cst_29 = arith.constant 0.000000e+00 : f32
    %76 = vector.broadcast %cst_29 : f32 to vector<1x128xf32>
    %77 = arith.maximumf %75, %76 : vector<1x128xf32>
    %78 = vector.extract_strided_slice %3 {offsets = [4, 0], sizes = [1, 128], strides = [1, 1]} : vector<7x128xf32> to vector<1x128xf32>
    %79 = vector.extract_strided_slice %3 {offsets = [5, 0], sizes = [1, 128], strides = [1, 1]} : vector<7x128xf32> to vector<1x128xf32>
    %cst_30 = arith.constant 9.99999974E-6 : f32
    %80 = vector.broadcast %cst_30 : f32 to vector<1x128xf32>
    %81 = arith.addf %77, %80 : vector<1x128xf32>
    %82 = math.rsqrt %81 : vector<1x128xf32>
    %83 = arith.mulf %78, %82 : vector<1x128xf32>
    %84 = arith.mulf %68, %83 : vector<1x128xf32>
    %85 = arith.subf %79, %84 : vector<1x128xf32>
    %86 = vector.broadcast %83 : vector<1x128xf32> to vector<64x128xf32>
    %87 = arith.mulf %64, %86 : vector<64x128xf32>
    %88 = vector.broadcast %85 : vector<1x128xf32> to vector<64x128xf32>
    %89 = arith.addf %87, %88 : vector<64x128xf32>
    %cst_31 = arith.constant 0.000000e+00 : f32
    %90 = vector.broadcast %cst_31 : f32 to vector<64x128xf32>
    %91 = arith.maximumf %89, %90 : vector<64x128xf32>
    %c0_32 = arith.constant 0 : index
    %c0_33 = arith.constant 0 : index
    %92 = vector.load %arg5[%c0_32, %c0_33] : memref<128x128xf32, #tpu.memory_space<vmem>>, vector<128x128xf32>
    %cst_34 = arith.constant dense<0.000000e+00> : vector<64x128xf32>
    %93 = tpu.matmul %91, %92, %cst_34 {dimension_numbers = #tpu.dot_dimension_numbers<[1], [0], [0], [1], [0, 0, 1, 1], [], []>} : vector<64x128xf32>, vector<128x128xf32>, vector<64x128xf32> -> vector<64x128xf32>
    %94 = vector.extract_strided_slice %3 {offsets = [6, 0], sizes = [1, 128], strides = [1, 1]} : vector<7x128xf32> to vector<1x128xf32>
    %95 = vector.broadcast %94 : vector<1x128xf32> to vector<64x128xf32>
    %96 = arith.addf %93, %95 : vector<64x128xf32>
    %97 = tpu.iota {dimensions = array<i32: 1>} : vector<64x128xi32>
    %c4_i32 = arith.constant 4 : i32
    %98 = vector.broadcast %c4_i32 : i32 to vector<64x128xi32>
    %99 = arith.cmpi slt, %97, %98 : vector<64x128xi32>
    %100 = arith.mulf %96, %96 : vector<64x128xf32>
    %cst_35 = arith.constant 0.000000e+00 : f32
    %101 = vector.broadcast %cst_35 : f32 to vector<64x128xf32>
    %102 = arith.select %99, %100, %101 : vector<64x128xi1>, vector<64x128xf32>
    %cst_36 = arith.constant dense<0.000000e+00> : vector<64xf32>
    %103 = vector.multi_reduction <add>, %102, %cst_36 [1] : vector<64x128xf32> to vector<64xf32>
    %104 = vector.shape_cast %103 : vector<64xf32> to vector<64x1xf32>
    %cst_37 = arith.constant 1.000000e-24 : f32
    %105 = vector.broadcast %cst_37 : f32 to vector<64x1xf32>
    %106 = arith.maximumf %104, %105 : vector<64x1xf32>
    %107 = math.rsqrt %106 : vector<64x1xf32>
    %108 = vector.broadcast %107 : vector<64x1xf32> to vector<64x128xf32>
    %109 = arith.mulf %96, %108 : vector<64x128xf32>
    %cst_38 = arith.constant 0.000000e+00 : f32
    %110 = vector.broadcast %cst_38 : f32 to vector<64x128xf32>
    %111 = arith.subf %110, %96 : vector<64x128xf32>
    %112 = math.exp %111 : vector<64x128xf32>
    %cst_39 = arith.constant 1.000000e+00 : f32
    %113 = vector.broadcast %cst_39 : f32 to vector<64x128xf32>
    %114 = arith.addf %113, %112 : vector<64x128xf32>
    %115 = tpu.reciprocal %114 {approx = true} : vector<64x128xf32> -> vector<64x128xf32>
    %116 = arith.mulf %114, %115 : vector<64x128xf32>
    %cst_40 = arith.constant 2.000000e+00 : f32
    %117 = vector.broadcast %cst_40 : f32 to vector<64x128xf32>
    %118 = arith.subf %117, %116 : vector<64x128xf32>
    %119 = arith.mulf %115, %118 : vector<64x128xf32>
    %120 = arith.select %99, %109, %119 : vector<64x128xi1>, vector<64x128xf32>
    %c0_41 = arith.constant 0 : index
    %c0_42 = arith.constant 0 : index
    %121 = vector.load %arg6[%c0_41, %c0_42] : memref<64x128xf32, #tpu.memory_space<vmem>>, vector<64x128xf32>
    tpu.vector_store %arg6[%c0_41, %c0_42], %120 {strides = array<i32>} : memref<64x128xf32, #tpu.memory_space<vmem>>, vector<64x128xf32>,
    return
  }
}

</mosaic_0001>

<llo_original>
// kernel: tpu_custom_call.1
$region0: #{tpu_custom_call.1}
  #allocation0 [shape = 'u32[]', space=smem, size = 0x4, offset = 0x4, fixed_abs, tag = 'smem constant byte address 0x4 - core index']
  #allocation1 [shape = 'u32[144,128]{1,0:T(1,128)}', space=vmem, size = 0x12000, scoped, tag = 'internal scratch']
  %s0 = inlined_call_operand.vmem [shape: f32[64,27], index: 0, kind: input, shape index: {}]
  %s1 = inlined_call_operand.vmem [shape: f32[27,256], index: 1, kind: input, shape index: {}]
  %s2 = inlined_call_operand.hbm [shape: f32[128,128], index: 2, kind: input, shape index: {}]
  %s3 = inlined_call_operand.hbm [shape: f32[128,128], index: 3, kind: input, shape index: {}]
  %s4 = inlined_call_operand.vmem [shape: f32[7,128], index: 4, kind: input, shape index: {}]
  %s5 = inlined_call_operand.hbm [shape: f32[128,128], index: 5, kind: input, shape index: {}]
  %s6 = inlined_call_operand.hbm [shape: f32[64,128], index: 6, kind: output, shape index: {}]
  %s7 = sld [smem:[#allocation0]]
  $region46: #{tpu_custom_call.1} parent=0
    _
  %s9 = ssub.s32 1, %s7
  %s10 = scalar_select 0, %s9, %s7
  $region1: #{tpu_custom_call.1} parent=0
    #allocation2 [shape = 'u8[65536]{0}', space=vmem, size = 0x10000, scoped, tag = 'input window, operand 2, single buffered']
    #allocation3 [shape = 's32[1]{0}', space=sflag, size = 0x4, scoped, tag = 'scoped memory for tpu_custom_call.1']
    #allocation4 [shape = 's32[1]{0}', space=sflag, size = 0x4, scoped, tag = 'scoped memory for tpu_custom_call.1']
    #allocation5 [shape = 'u8[65536]{0}', space=vmem, size = 0x10000, scoped, tag = 'input window, operand 3, single buffered']
    #allocation6 [shape = 's32[1]{0}', space=sflag, size = 0x4, scoped, tag = 'scoped memory for tpu_custom_call.1']
    #allocation7 [shape = 'u8[65536]{0}', space=vmem, size = 0x10000, scoped, tag = 'input window, operand 5, single buffered']
    #allocation8 [shape = 'u8[32768]{0}', space=vmem, size = 0x8000, scoped, tag = 'output window, operand 0, single buffered']
    %11 = vsyncpa [#allocation3], 0
    %12 = vsyncpa [#allocation6], 0
    %13 = vsyncpa [#allocation4], 0
    // Predicated region
    $region2: #{tpu_custom_call.1} parent=1 // pred_check
      _
    $region3: #{tpu_custom_call.1} parent=1 // pred_check_branch
      %15 = sbr.rel (0) target = $region5
    $region4: #{tpu_custom_call.1} parent=1 // pred_region
      _
    $region5: #{tpu_custom_call.1} parent=1 // pred_fallthru
      _
    // Predicated region
    $region6: #{tpu_custom_call.1} parent=1 // pred_check
      _
    $region7: #{tpu_custom_call.1} parent=1 // pred_check_branch
      %17 = sbr.rel (0) target = $region9
    $region8: #{tpu_custom_call.1} parent=1 // pred_region
      _
    $region9: #{tpu_custom_call.1} parent=1 // pred_fallthru
      _
    // Predicated region
    $region10: #{tpu_custom_call.1} parent=1 // pred_check
      _
    $region11: #{tpu_custom_call.1} parent=1 // pred_check_branch
      %19 = sbr.rel (0) target = $region13
    $region12: #{tpu_custom_call.1} parent=1 // pred_region
      %s21 = ssub.s32 2048, 2048
      %22 = vsyncadd [#allocation3], %s21
      %s23 = sshll.u32 [#allocation2], 4
      %s24 = int_to_ptr.vmem [resolvable:$true] %s23
      %29 = dma.hbm_to_vmem [thread:$0]  %s2, 2048, %s24, [#allocation3], 128, 128, 8
    $region13: #{tpu_custom_call.1} parent=1 // pred_fallthru
      _
    // Predicated region
    $region14: #{tpu_custom_call.1} parent=1 // pred_check
      _
    $region15: #{tpu_custom_call.1} parent=1 // pred_check_branch
      %31 = sbr.rel (0) target = $region17
    $region16: #{tpu_custom_call.1} parent=1 // pred_region
      %s33 = ssub.s32 2048, 2048
      %34 = vsyncadd [#allocation6], %s33
      %s35 = sshll.u32 [#allocation5], 4
      %s36 = int_to_ptr.vmem [resolvable:$true] %s35
      %41 = dma.hbm_to_vmem [thread:$0]  %s3, 2048, %s36, [#allocation6], 128, 128, 8
    $region17: #{tpu_custom_call.1} parent=1 // pred_fallthru
      _
    // Predicated region
    $region18: #{tpu_custom_call.1} parent=1 // pred_check
      _
    $region19: #{tpu_custom_call.1} parent=1 // pred_check_branch
      %43 = sbr.rel (0) target = $region21
    $region20: #{tpu_custom_call.1} parent=1 // pred_region
      _
    $region21: #{tpu_custom_call.1} parent=1 // pred_fallthru
      _
    // Predicated region
    $region22: #{tpu_custom_call.1} parent=1 // pred_check
      _
    $region23: #{tpu_custom_call.1} parent=1 // pred_check_branch
      %45 = sbr.rel (0) target = $region25
    $region24: #{tpu_custom_call.1} parent=1 // pred_region
      %s47 = ssub.s32 2048, 2048
      %48 = vsyncadd [#allocation6], %s47
      %s49 = sshll.u32 [#allocation7], 4
      %s50 = int_to_ptr.vmem [resolvable:$true] %s49
      %55 = dma.hbm_to_vmem [thread:$0]  %s5, 2048, %s50, [#allocation6], 128, 128, 8
    $region25: #{tpu_custom_call.1} parent=1 // pred_fallthru
      _
    // Predicated region
    $region26: #{tpu_custom_call.1} parent=1 // pred_check
      _
    $region27: #{tpu_custom_call.1} parent=1 // pred_check_branch
      %57 = sbr.rel (0) target = $region29
    $region28: #{tpu_custom_call.1} parent=1 // pred_region
      %58 = dma.done [#allocation3], 2048
    $region29: #{tpu_custom_call.1} parent=1 // pred_fallthru
      _
    // Predicated region
    $region30: #{tpu_custom_call.1} parent=1 // pred_check
      _
    $region31: #{tpu_custom_call.1} parent=1 // pred_check_branch
      %60 = sbr.rel (0) target = $region33
    $region32: #{tpu_custom_call.1} parent=1 // pred_region
      %61 = dma.done [#allocation6], 2048
    $region33: #{tpu_custom_call.1} parent=1 // pred_fallthru
      _
    // Predicated region
    $region34: #{tpu_custom_call.1} parent=1 // pred_check
      _
    $region35: #{tpu_custom_call.1} parent=1 // pred_check_branch
      %63 = sbr.rel (0) target = $region37
    $region36: #{tpu_custom_call.1} parent=1 // pred_region
      %64 = dma.done [#allocation6], 2048
    $region37: #{tpu_custom_call.1} parent=1 // pred_fallthru
      _
    %v65 = vld [vmem:[%s0] sm:$0xff]
    %v66 = vld [vmem:[%s0 + $0x8] sm:$0xff]
    %v67 = vld [vmem:[%s0 + $0x10] sm:$0xff]
    %v68 = vld [vmem:[%s0 + $0x18] sm:$0xff]
    %v69 = vld [vmem:[%s0 + $0x20] sm:$0xff]
    %v70 = vld [vmem:[%s0 + $0x28] sm:$0xff]
    %v71 = vld [vmem:[%s0 + $0x30] sm:$0xff]
    %v72 = vld [vmem:[%s0 + $0x38] sm:$0xff]
    %v73 = vld [vmem:[%s1] sm:$0xff]
    %v74 = vld [vmem:[%s1 + $0x8] sm:$0xff]
    %v75 = vld [vmem:[%s1 + $0x10] sm:$0xff]
    %v76 = vld [vmem:[%s1 + $0x18] sm:$0xff]
    %v77 = vld [vmem:[%s1 + $0x20] sm:$0xff]
    %v78 = vld [vmem:[%s1 + $0x28] sm:$0xff]
    %v79 = vld [vmem:[%s1 + $0x30] sm:$0x7]
    %v80 = vld [vmem:[%s1 + $0x38] sm:$0x7]
    %vm81 = vcmask 220160
    %v83 = vsel %vm81, %v65, 0
    %v86 = vsel %vm81, %v66, 0
    %v89 = vsel %vm81, %v67, 0
    %v92 = vsel %vm81, %v68, 0
    %v95 = vsel %vm81, %v69, 0
    %v98 = vsel %vm81, %v70, 0
    %v101 = vsel %vm81, %v71, 0
    %v104 = vsel %vm81, %v72, 0
    %vm106 = vcmask 1042432
    %v108 = vsel %vm106, %v79, 0
    %v111 = vsel %vm106, %v80, 0
    %113 = vmatprep.subr.mxu0 %v74
    %114 = vmatpush1.msra.mxu0 %v73
    %115 = vmatprep.subr.mxu0 %v76
    %116 = vmatpush1.msra.mxu0 %v75
    %117 = vmatprep.subr.mxu0 %v78
    %118 = vmatpush1.msra.mxu0 %v77
    %119 = vmatprep.subr.mxu0 %v111
    %120 = vmatpush1.msra.mxu0 %v108
    %121 = vmatprep.subr.mxu0 0.0
    %122 = vmatpush1.msra.mxu0 0.0
    %123 = vmatprep.subr.mxu0 0.0
    %124 = vmatpush1.msra.mxu0 0.0
    %125 = vmatprep.subr.mxu0 0.0
    %126 = vmatpush1.msra.mxu0 0.0
    %127 = vmatprep.subr.mxu0 0.0
    %128 = vmatpush1.msra.mxu0 0.0
    %129 = vmatprep.subr.mxu0 0.0
    %130 = vmatpush1.msra.mxu0 0.0
    %131 = vmatprep.subr.mxu0 0.0
    %132 = vmatpush1.msra.mxu0 0.0
    %133 = vmatprep.subr.mxu0 0.0
    %134 = vmatpush1.msra.mxu0 0.0
    %135 = vmatprep.subr.mxu0 0.0
    %136 = vmatpush1.msra.mxu0 0.0
    %137 = vmatprep.subr.mxu0 0.0
    %138 = vmatpush1.msra.mxu0 0.0
    %139 = vmatprep.subr.mxu0 0.0
    %140 = vmatpush1.msra.mxu0 0.0
    %141 = vmatprep.subr.mxu0 0.0
    %142 = vmatpush1.msra.mxu0 0.0
    %143 = vmatprep.subr.mxu0 0.0
    %144 = vmatpush1.msra.mxu0 0.0
    %145 = vmatprep.subr.mxu0 0.0
    %146 = vmatpush1.msra.mxu0 0.0
    %147 = vmatprep.subr.mxu0 0.0
    %148 = vmatpush1.msra.mxu0 0.0
    %149 = vmatprep.subr.mxu0 0.0
    %150 = vmatpush1.msra.mxu0 0.0
    %151 = vmatprep.subr.mxu0 0.0
    %152 = vmatpush1.msra.mxu0 0.0
    %153 = vmatprep.subr.mxu0 0.0
    %154 = vmatpush1.msra.mxu0 0.0
    %155 = vmatprep.subr.mxu0 0.0
    %156 = vmatpush1.msra.mxu0 0.0
    %157 = vmatprep.subr.mxu0 0.0
    %158 = vmatpush1.msra.mxu0 0.0
    %159 = vmatprep.subr.mxu0 0.0
    %160 = vmatpush1.msra.mxu0 0.0
    %161 = vmatprep.subr.mxu0 0.0
    %162 = vmatpush1.msra.mxu0 0.0
    %163 = vmatprep.subr.mxu0 0.0
    %164 = vmatpush1.msra.mxu0 0.0
    %165 = vmatprep.subr.mxu0 0.0
    %166 = vmatpush1.msra.mxu0 0.0
    %167 = vmatprep.subr.mxu0 0.0
    %168 = vmatpush1.msra.mxu0 0.0
    %169 = vmatprep.subr.mxu0 0.0
    %170 = vmatpush1.msra.mxu0 0.0
    %171 = vmatprep.subr.mxu0 0.0
    %172 = vmatpush1.msra.mxu0 0.0
    %173 = vmatprep.subr.mxu0 0.0
    %174 = vmatpush1.msra.mxu0 0.0
    %175 = vmatprep.subr.mxu0 0.0
    %176 = vmatpush1.msra.mxu0 0.0
    %177 = vmatprep.mubr.f32.mxu0 0.0
    %178 = vmatmul.mubr.f32.gmra.mrb[0].mxu0 %v83
    %v179 = vpop.f32.mrb[0].mxu0
    %v180 = vadd.f32 0.0, %v179
    %v181 = vpop.f32.mrb[0].mxu0
    %v182 = vadd.f32 0.0, %v181
    %183 = vmatprep.mubr.f32.mxu0 0.0
    %184 = vmatmul.mubr.f32.gmra.mrb[0].mxu0 %v86
    %v185 = vpop.f32.mrb[0].mxu0
    %v186 = vadd.f32 0.0, %v185
    %v187 = vpop.f32.mrb[0].mxu0
    %v188 = vadd.f32 0.0, %v187
    %189 = vmatprep.mubr.f32.mxu0 0.0
    %190 = vmatmul.mubr.f32.gmra.mrb[0].mxu0 %v89
    %v191 = vpop.f32.mrb[0].mxu0
    %v192 = vadd.f32 0.0, %v191
    %v193 = vpop.f32.mrb[0].mxu0
    %v194 = vadd.f32 0.0, %v193
    %195 = vmatprep.mubr.f32.mxu0 0.0
    %196 = vmatmul.mubr.f32.gmra.mrb[0].mxu0 %v92
    %v197 = vpop.f32.mrb[0].mxu0
    %v198 = vadd.f32 0.0, %v197
    %v199 = vpop.f32.mrb[0].mxu0
    %v200 = vadd.f32 0.0, %v199
    %201 = vmatprep.mubr.f32.mxu0 0.0
    %202 = vmatmul.mubr.f32.gmra.mrb[0].mxu0 %v95
    %v203 = vpop.f32.mrb[0].mxu0
    %v204 = vadd.f32 0.0, %v203
    %v205 = vpop.f32.mrb[0].mxu0
    %v206 = vadd.f32 0.0, %v205
    %207 = vmatprep.mubr.f32.mxu0 0.0
    %208 = vmatmul.mubr.f32.gmra.mrb[0].mxu0 %v98
    %v209 = vpop.f32.mrb[0].mxu0
    %v210 = vadd.f32 0.0, %v209
    %v211 = vpop.f32.mrb[0].mxu0
    %v212 = vadd.f32 0.0, %v211
    %213 = vmatprep.mubr.f32.mxu0 0.0
    %214 = vmatmul.mubr.f32.gmra.mrb[0].mxu0 %v101
    %v215 = vpop.f32.mrb[0].mxu0
    %v216 = vadd.f32 0.0, %v215
    %v217 = vpop.f32.mrb[0].mxu0
    %v218 = vadd.f32 0.0, %v217
    %219 = vmatprep.mubr.f32.mxu0 0.0
    %220 = vmatmul.mubr.f32.gmra.mrb[0].mxu0 %v104
    %v221 = vpop.f32.mrb[0].mxu0
    %v222 = vadd.f32 0.0, %v221
    %v223 = vpop.f32.mrb[0].mxu0
    %v224 = vadd.f32 0.0, %v223
    %225 = vdwg.mxu0
    %v226 = vld [vmem:[%s4] sm:$0x7f]
    %v227 = vadd.f32 %v180, %v186
    %v228 = vadd.f32 %v227, %v192
    %v229 = vadd.f32 %v228, %v198
    %v230 = vadd.f32 %v229, %v204
    %v231 = vadd.f32 %v230, %v210
    %v232 = vadd.f32 %v231, %v216
    %v233 = vadd.f32 %v232, %v222
    %v234 = vrot.slane %v233, 4
    %v235 = vadd.f32 %v233, %v234
    %v236 = vrot.slane %v235, 2
    %v237 = vadd.f32 %v235, %v236
    %v238 = vrot.slane %v237, 1
    %v239 = vadd.f32 %v237, %v238
    %v240 = vmul.f32 %v239, 0.015625
    %v241 = vmul.f32 %v180, %v180
    %v242 = vmul.f32 %v186, %v186
    %v243 = vmul.f32 %v192, %v192
    %v244 = vmul.f32 %v198, %v198
    %v245 = vmul.f32 %v204, %v204
    %v246 = vmul.f32 %v210, %v210
    %v247 = vmul.f32 %v216, %v216
    %v248 = vmul.f32 %v222, %v222
    %v249 = vadd.f32 %v241, %v242
    %v250 = vadd.f32 %v249, %v243
    %v251 = vadd.f32 %v250, %v244
    %v252 = vadd.f32 %v251, %v245
    %v253 = vadd.f32 %v252, %v246
    %v254 = vadd.f32 %v253, %v247
    %v255 = vadd.f32 %v254, %v248
    %v256 = vrot.slane %v255, 4
    %v257 = vadd.f32 %v255, %v256
    %v258 = vrot.slane %v257, 2
    %v259 = vadd.f32 %v257, %v258
    %v260 = vrot.slane %v259, 1
    %v261 = vadd.f32 %v259, %v260
    %v262 = vmul.f32 %v261, 0.015625
    %v263 = vmul.f32 %v240, %v240
    %v264 = vsub.f32 %v262, %v263
    %v265 = vmax.f32 %v264, 0.0
    %v266 = vadd.f32 %v265, 1e-05
    %v267 = vrsqrt.pop %v266
    %v268 = vmul.f32 %v226, %v267
    %v269 = vmul.f32 %v240, %v268
    %v271 = vrot.slane %v269, 7
    %v273 = vsub.f32 %v226, %v271
    %v274 = vlaneseq
    %v275 = vshrl.u32 %v274, 7
    %v276 = vsub.s32 0, %v275
    %v277 = vrot.slane %v268, %v276
    %v278 = vmul.f32 %v180, %v277
    %v279 = vmul.f32 %v186, %v277
    %v280 = vmul.f32 %v192, %v277
    %v281 = vmul.f32 %v198, %v277
    %v282 = vmul.f32 %v204, %v277
    %v283 = vmul.f32 %v210, %v277
    %v284 = vmul.f32 %v216, %v277
    %v285 = vmul.f32 %v222, %v277
    %v286 = vlaneseq
    %v287 = vshrl.u32 %v286, 7
    %v288 = vsub.s32 1, %v287
    %v289 = vrot.slane %v273, %v288
    %v290 = vadd.f32 %v278, %v289
    %v291 = vadd.f32 %v279, %v289
    %v292 = vadd.f32 %v280, %v289
    %v293 = vadd.f32 %v281, %v289
    %v294 = vadd.f32 %v282, %v289
    %v295 = vadd.f32 %v283, %v289
    %v296 = vadd.f32 %v284, %v289
    %v297 = vadd.f32 %v285, %v289
    %v298 = vmax.f32 %v290, 0.0
    %v299 = vmax.f32 %v291, 0.0
    %v300 = vmax.f32 %v292, 0.0
    %v301 = vmax.f32 %v293, 0.0
    %v302 = vmax.f32 %v294, 0.0
    %v303 = vmax.f32 %v295, 0.0
    %v304 = vmax.f32 %v296, 0.0
    %v305 = vmax.f32 %v297, 0.0
    %v306 = vld [vmem:[#allocation2] sm:$0xff]
    %v307 = vld [vmem:[#allocation2 + $0x8] sm:$0xff]
    %v308 = vld [vmem:[#allocation2 + $0x10] sm:$0xff]
    %v309 = vld [vmem:[#allocation2 + $0x18] sm:$0xff]
    %v310 = vld [vmem:[#allocation2 + $0x20] sm:$0xff]
    %v311 = vld [vmem:[#allocation2 + $0x28] sm:$0xff]
    %v312 = vld [vmem:[#allocation2 + $0x30] sm:$0xff]
    %v313 = vld [vmem:[#allocation2 + $0x38] sm:$0xff]
    %v314 = vld [vmem:[#allocation2 + $0x40] sm:$0xff]
    %v315 = vld [vmem:[#allocation2 + $0x48] sm:$0xff]
    %v316 = vld [vmem:[#allocation2 + $0x50] sm:$0xff]
    %v317 = vld [vmem:[#allocation2 + $0x58] sm:$0xff]
    %v318 = vld [vmem:[#allocation2 + $0x60] sm:$0xff]
    %v319 = vld [vmem:[#allocation2 + $0x68] sm:$0xff]
    %v320 = vld [vmem:[#allocation2 + $0x70] sm:$0xff]
    %v321 = vld [vmem:[#allocation2 + $0x78] sm:$0xff]
    %322 = vmatprep.subr.mxu0 0.0
    %323 = vmatpush1.msra.mxu0 %v306
    %324 = vmatprep.subr.mxu0 0.0
    %325 = vmatpush1.msra.mxu0 %v307
    %326 = vmatprep.subr.mxu0 0.0
    %327 = vmatpush1.msra.mxu0 %v308
    %328 = vmatprep.subr.mxu0 0.0
    %329 = vmatpush1.msra.mxu0 %v309
    %330 = vmatprep.subr.mxu0 0.0
    %331 = vmatpush1.msra.mxu0 %v310
    %332 = vmatprep.subr.mxu0 0.0
    %333 = vmatpush1.msra.mxu0 %v311
    %334 = vmatprep.subr.mxu0 0.0
    %335 = vmatpush1.msra.mxu0 %v312
    %336 = vmatprep.subr.mxu0 0.0
    %337 = vmatpush1.msra.mxu0 %v313
    %338 = vmatprep.subr.mxu0 0.0
    %339 = vmatpush1.msra.mxu0 %v314
    %340 = vmatprep.subr.mxu0 0.0
    %341 = vmatpush1.msra.mxu0 %v315
    %342 = vmatprep.subr.mxu0 0.0
    %343 = vmatpush1.msra.mxu0 %v316
    %344 = vmatprep.subr.mxu0 0.0
    %345 = vmatpush1.msra.mxu0 %v317
    %346 = vmatprep.subr.mxu0 0.0
    %347 = vmatpush1.msra.mxu0 %v318
    %348 = vmatprep.subr.mxu0 0.0
    %349 = vmatpush1.msra.mxu0 %v319
    %350 = vmatprep.subr.mxu0 0.0
    %351 = vmatpush1.msra.mxu0 %v320
    %352 = vmatprep.subr.mxu0 0.0
    %353 = vmatpush1.msra.mxu0 %v321
    %354 = vmatprep.subr.mxu0 0.0
    %355 = vmatpush1.msra.mxu0 0.0
    %356 = vmatprep.subr.mxu0 0.0
    %357 = vmatpush1.msra.mxu0 0.0
    %358 = vmatprep.subr.mxu0 0.0
    %359 = vmatpush1.msra.mxu0 0.0
    %360 = vmatprep.subr.mxu0 0.0
    %361 = vmatpush1.msra.mxu0 0.0
    %362 = vmatprep.subr.mxu0 0.0
    %363 = vmatpush1.msra.mxu0 0.0
    %364 = vmatprep.subr.mxu0 0.0
    %365 = vmatpush1.msra.mxu0 0.0
    %366 = vmatprep.subr.mxu0 0.0
    %367 = vmatpush1.msra.mxu0 0.0
    %368 = vmatprep.subr.mxu0 0.0
    %369 = vmatpush1.msra.mxu0 0.0
    %370 = vmatprep.subr.mxu0 0.0
    %371 = vmatpush1.msra.mxu0 0.0
    %372 = vmatprep.subr.mxu0 0.0
    %373 = vmatpush1.msra.mxu0 0.0
    %374 = vmatprep.subr.mxu0 0.0
    %375 = vmatpush1.msra.mxu0 0.0
    %376 = vmatprep.subr.mxu0 0.0
    %377 = vmatpush1.msra.mxu0 0.0
    %378 = vmatprep.subr.mxu0 0.0
    %379 = vmatpush1.msra.mxu0 0.0
    %380 = vmatprep.subr.mxu0 0.0
    %381 = vmatpush1.msra.mxu0 0.0
    %382 = vmatprep.subr.mxu0 0.0
    %383 = vmatpush1.msra.mxu0 0.0
    %384 = vmatprep.subr.mxu0 0.0
    %385 = vmatpush1.msra.mxu0 0.0
    %386 = vmatprep.mubr.f32.mxu0 0.0
    %387 = vmatmul.mubr.f32.gmra.mrb[0].mxu0 %v298
    %v388 = vpop.f32.mrb[0].mxu0
    %v389 = vadd.f32 0.0, %v388
    %v390 = vpop.f32.mrb[0].mxu0
    %391 = vmatprep.mubr.f32.mxu0 0.0
    %392 = vmatmul.mubr.f32.gmra.mrb[0].mxu0 %v299
    %v393 = vpop.f32.mrb[0].mxu0
    %v394 = vadd.f32 0.0, %v393
    %v395 = vpop.f32.mrb[0].mxu0
    %396 = vmatprep.mubr.f32.mxu0 0.0
    %397 = vmatmul.mubr.f32.gmra.mrb[0].mxu0 %v300
    %v398 = vpop.f32.mrb[0].mxu0
    %v399 = vadd.f32 0.0, %v398
    %v400 = vpop.f32.mrb[0].mxu0
    %401 = vmatprep.mubr.f32.mxu0 0.0
    %402 = vmatmul.mubr.f32.gmra.mrb[0].mxu0 %v301
    %v403 = vpop.f32.mrb[0].mxu0
    %v404 = vadd.f32 0.0, %v403
    %v405 = vpop.f32.mrb[0].mxu0
    %406 = vmatprep.mubr.f32.mxu0 0.0
    %407 = vmatmul.mubr.f32.gmra.mrb[0].mxu0 %v302
    %v408 = vpop.f32.mrb[0].mxu0
    %v409 = vadd.f32 0.0, %v408
    %v410 = vpop.f32.mrb[0].mxu0
    %411 = vmatprep.mubr.f32.mxu0 0.0
    %412 = vmatmul.mubr.f32.gmra.mrb[0].mxu0 %v303
    %v413 = vpop.f32.mrb[0].mxu0
    %v414 = vadd.f32 0.0, %v413
    %v415 = vpop.f32.mrb[0].mxu0
    %416 = vmatprep.mubr.f32.mxu0 0.0
    %417 = vmatmul.mubr.f32.gmra.mrb[0].mxu0 %v304
    %v418 = vpop.f32.mrb[0].mxu0
    %v419 = vadd.f32 0.0, %v418
    %v420 = vpop.f32.mrb[0].mxu0
    %421 = vmatprep.mubr.f32.mxu0 0.0
    %422 = vmatmul.mubr.f32.gmra.mrb[0].mxu0 %v305
    %v423 = vpop.f32.mrb[0].mxu0
    %v424 = vadd.f32 0.0, %v423
    %v425 = vpop.f32.mrb[0].mxu0
    %426 = vdwg.mxu0
    %v427 = vadd.f32 %v182, %v389
    %v428 = vadd.f32 %v188, %v394
    %v429 = vadd.f32 %v194, %v399
    %v430 = vadd.f32 %v200, %v404
    %v431 = vadd.f32 %v206, %v409
    %v432 = vadd.f32 %v212, %v414
    %v433 = vadd.f32 %v218, %v419
    %v434 = vadd.f32 %v224, %v424
    %v435 = vadd.f32 %v427, %v428
    %v436 = vadd.f32 %v435, %v429
    %v437 = vadd.f32 %v436, %v430
    %v438 = vadd.f32 %v437, %v431
    %v439 = vadd.f32 %v438, %v432
    %v440 = vadd.f32 %v439, %v433
    %v441 = vadd.f32 %v440, %v434
    %v442 = vrot.slane %v441, 4
    %v443 = vadd.f32 %v441, %v442
    %v444 = vrot.slane %v443, 2
    %v445 = vadd.f32 %v443, %v444
    %v446 = vrot.slane %v445, 1
    %v447 = vadd.f32 %v445, %v446
    %v448 = vmul.f32 %v447, 0.015625
    %v449 = vmul.f32 %v427, %v427
    %v450 = vmul.f32 %v428, %v428
    %v451 = vmul.f32 %v429, %v429
    %v452 = vmul.f32 %v430, %v430
    %v453 = vmul.f32 %v431, %v431
    %v454 = vmul.f32 %v432, %v432
    %v455 = vmul.f32 %v433, %v433
    %v456 = vmul.f32 %v434, %v434
    %v457 = vadd.f32 %v449, %v450
    %v458 = vadd.f32 %v457, %v451
    %v459 = vadd.f32 %v458, %v452
    %v460 = vadd.f32 %v459, %v453
    %v461 = vadd.f32 %v460, %v454
    %v462 = vadd.f32 %v461, %v455
    %v463 = vadd.f32 %v462, %v456
    %v464 = vrot.slane %v463, 4
    %v465 = vadd.f32 %v463, %v464
    %v466 = vrot.slane %v465, 2
    %v467 = vadd.f32 %v465, %v466
    %v468 = vrot.slane %v467, 1
    %v469 = vadd.f32 %v467, %v468
    %v470 = vmul.f32 %v469, 0.015625
    %v471 = vmul.f32 %v448, %v448
    %v472 = vsub.f32 %v470, %v471
    %v473 = vmax.f32 %v472, 0.0
    %v474 = vadd.f32 %v473, 1e-05
    %v475 = vrsqrt.pop %v474
    %v476 = vmul.f32 %v226, %v475
    %v477 = vmul.f32 %v448, %v476
    %v479 = vrot.slane %v477, 7
    %v481 = vsub.f32 %v226, %v479
    %v482 = vlaneseq
    %v483 = vshrl.u32 %v482, 7
    %v484 = vsub.s32 2, %v483
    %v485 = vrot.slane %v476, %v484
    %v486 = vmul.f32 %v427, %v485
    %v487 = vmul.f32 %v428, %v485
    %v488 = vmul.f32 %v429, %v485
    %v489 = vmul.f32 %v430, %v485
    %v490 = vmul.f32 %v431, %v485
    %v491 = vmul.f32 %v432, %v485
    %v492 = vmul.f32 %v433, %v485
    %v493 = vmul.f32 %v434, %v485
    %v494 = vlaneseq
    %v495 = vshrl.u32 %v494, 7
    %v496 = vsub.s32 3, %v495
    %v497 = vrot.slane %v481, %v496
    %v498 = vadd.f32 %v486, %v497
    %v499 = vadd.f32 %v487, %v497
    %v500 = vadd.f32 %v488, %v497
    %v501 = vadd.f32 %v489, %v497
    %v502 = vadd.f32 %v490, %v497
    %v503 = vadd.f32 %v491, %v497
    %v504 = vadd.f32 %v492, %v497
    %v505 = vadd.f32 %v493, %v497
    %v506 = vmax.f32 %v498, 0.0
    %v507 = vmax.f32 %v499, 0.0
    %v508 = vmax.f32 %v500, 0.0
    %v509 = vmax.f32 %v501, 0.0
    %v510 = vmax.f32 %v502, 0.0
    %v511 = vmax.f32 %v503, 0.0
    %v512 = vmax.f32 %v504, 0.0
    %v513 = vmax.f32 %v505, 0.0
    %v514 = vld [vmem:[#allocation5] sm:$0xff]
    %v515 = vld [vmem:[#allocation5 + $0x8] sm:$0xff]
    %v516 = vld [vmem:[#allocation5 + $0x10] sm:$0xff]
    %v517 = vld [vmem:[#allocation5 + $0x18] sm:$0xff]
    %v518 = vld [vmem:[#allocation5 + $0x20] sm:$0xff]
    %v519 = vld [vmem:[#allocation5 + $0x28] sm:$0xff]
    %v520 = vld [vmem:[#allocation5 + $0x30] sm:$0xff]
    %v521 = vld [vmem:[#allocation5 + $0x38] sm:$0xff]
    %v522 = vld [vmem:[#allocation5 + $0x40] sm:$0xff]
    %v523 = vld [vmem:[#allocation5 + $0x48] sm:$0xff]
    %v524 = vld [vmem:[#allocation5 + $0x50] sm:$0xff]
    %v525 = vld [vmem:[#allocation5 + $0x58] sm:$0xff]
    %v526 = vld [vmem:[#allocation5 + $0x60] sm:$0xff]
    %v527 = vld [vmem:[#allocation5 + $0x68] sm:$0xff]
    %v528 = vld [vmem:[#allocation5 + $0x70] sm:$0xff]
    %v529 = vld [vmem:[#allocation5 + $0x78] sm:$0xff]
    %530 = vmatprep.subr.mxu0 0.0
    %531 = vmatpush1.msra.mxu0 %v514
    %532 = vmatprep.subr.mxu0 0.0
    %533 = vmatpush1.msra.mxu0 %v515
    %534 = vmatprep.subr.mxu0 0.0
    %535 = vmatpush1.msra.mxu0 %v516
    %536 = vmatprep.subr.mxu0 0.0
    %537 = vmatpush1.msra.mxu0 %v517
    %538 = vmatprep.subr.mxu0 0.0
    %539 = vmatpush1.msra.mxu0 %v518
    %540 = vmatprep.subr.mxu0 0.0
    %541 = vmatpush1.msra.mxu0 %v519
    %542 = vmatprep.subr.mxu0 0.0
    %543 = vmatpush1.msra.mxu0 %v520
    %544 = vmatprep.subr.mxu0 0.0
    %545 = vmatpush1.msra.mxu0 %v521
    %546 = vmatprep.subr.mxu0 0.0
    %547 = vmatpush1.msra.mxu0 %v522
    %548 = vmatprep.subr.mxu0 0.0
    %549 = vmatpush1.msra.mxu0 %v523
    %550 = vmatprep.subr.mxu0 0.0
    %551 = vmatpush1.msra.mxu0 %v524
    %552 = vmatprep.subr.mxu0 0.0
    %553 = vmatpush1.msra.mxu0 %v525
    %554 = vmatprep.subr.mxu0 0.0
    %555 = vmatpush1.msra.mxu0 %v526
    %556 = vmatprep.subr.mxu0 0.0
    %557 = vmatpush1.msra.mxu0 %v527
    %558 = vmatprep.subr.mxu0 0.0
    %559 = vmatpush1.msra.mxu0 %v528
    %560 = vmatprep.subr.mxu0 0.0
    %561 = vmatpush1.msra.mxu0 %v529
    %562 = vmatprep.subr.mxu0 0.0
    %563 = vmatpush1.msra.mxu0 0.0
    %564 = vmatprep.subr.mxu0 0.0
    %565 = vmatpush1.msra.mxu0 0.0
    %566 = vmatprep.subr.mxu0 0.0
    %567 = vmatpush1.msra.mxu0 0.0
    %568 = vmatprep.subr.mxu0 0.0
    %569 = vmatpush1.msra.mxu0 0.0
    %570 = vmatprep.subr.mxu0 0.0
    %571 = vmatpush1.msra.mxu0 0.0
    %572 = vmatprep.subr.mxu0 0.0
    %573 = vmatpush1.msra.mxu0 0.0
    %574 = vmatprep.subr.mxu0 0.0
    %575 = vmatpush1.msra.mxu0 0.0
    %576 = vmatprep.subr.mxu0 0.0
    %577 = vmatpush1.msra.mxu0 0.0
    %578 = vmatprep.subr.mxu0 0.0
    %579 = vmatpush1.msra.mxu0 0.0
    %580 = vmatprep.subr.mxu0 0.0
    %581 = vmatpush1.msra.mxu0 0.0
    %582 = vmatprep.subr.mxu0 0.0
    %583 = vmatpush1.msra.mxu0 0.0
    %584 = vmatprep.subr.mxu0 0.0
    %585 = vmatpush1.msra.mxu0 0.0
    %586 = vmatprep.subr.mxu0 0.0
    %587 = vmatpush1.msra.mxu0 0.0
    %588 = vmatprep.subr.mxu0 0.0
    %589 = vmatpush1.msra.mxu0 0.0
    %590 = vmatprep.subr.mxu0 0.0
    %591 = vmatpush1.msra.mxu0 0.0
    %592 = vmatprep.subr.mxu0 0.0
    %593 = vmatpush1.msra.mxu0 0.0
    %594 = vmatprep.mubr.f32.mxu0 0.0
    %595 = vmatmul.mubr.f32.gmra.mrb[0].mxu0 %v506
    %v596 = vpop.f32.mrb[0].mxu0
    %v597 = vadd.f32 0.0, %v596
    %v598 = vpop.f32.mrb[0].mxu0
    %599 = vmatprep.mubr.f32.mxu0 0.0
    %600 = vmatmul.mubr.f32.gmra.mrb[0].mxu0 %v507
    %v601 = vpop.f32.mrb[0].mxu0
    %v602 = vadd.f32 0.0, %v601
    %v603 = vpop.f32.mrb[0].mxu0
    %604 = vmatprep.mubr.f32.mxu0 0.0
    %605 = vmatmul.mubr.f32.gmra.mrb[0].mxu0 %v508
    %v606 = vpop.f32.mrb[0].mxu0
    %v607 = vadd.f32 0.0, %v606
    %v608 = vpop.f32.mrb[0].mxu0
    %609 = vmatprep.mubr.f32.mxu0 0.0
    %610 = vmatmul.mubr.f32.gmra.mrb[0].mxu0 %v509
    %v611 = vpop.f32.mrb[0].mxu0
    %v612 = vadd.f32 0.0, %v611
    %v613 = vpop.f32.mrb[0].mxu0
    %614 = vmatprep.mubr.f32.mxu0 0.0
    %615 = vmatmul.mubr.f32.gmra.mrb[0].mxu0 %v510
    %v616 = vpop.f32.mrb[0].mxu0
    %v617 = vadd.f32 0.0, %v616
    %v618 = vpop.f32.mrb[0].mxu0
    %619 = vmatprep.mubr.f32.mxu0 0.0
    %620 = vmatmul.mubr.f32.gmra.mrb[0].mxu0 %v511
    %v621 = vpop.f32.mrb[0].mxu0
    %v622 = vadd.f32 0.0, %v621
    %v623 = vpop.f32.mrb[0].mxu0
    %624 = vmatprep.mubr.f32.mxu0 0.0
    %625 = vmatmul.mubr.f32.gmra.mrb[0].mxu0 %v512
    %v626 = vpop.f32.mrb[0].mxu0
    %v627 = vadd.f32 0.0, %v626
    %v628 = vpop.f32.mrb[0].mxu0
    %629 = vmatprep.mubr.f32.mxu0 0.0
    %630 = vmatmul.mubr.f32.gmra.mrb[0].mxu0 %v513
    %v631 = vpop.f32.mrb[0].mxu0
    %v632 = vadd.f32 0.0, %v631
    %v633 = vpop.f32.mrb[0].mxu0
    %634 = vdwg.mxu0
    %v635 = vadd.f32 %v597, %v602
    %v636 = vadd.f32 %v635, %v607
    %v637 = vadd.f32 %v636, %v612
    %v638 = vadd.f32 %v637, %v617
    %v639 = vadd.f32 %v638, %v622
    %v640 = vadd.f32 %v639, %v627
    %v641 = vadd.f32 %v640, %v632
    %v642 = vrot.slane %v641, 4
    %v643 = vadd.f32 %v641, %v642
    %v644 = vrot.slane %v643, 2
    %v645 = vadd.f32 %v643, %v644
    %v646 = vrot.slane %v645, 1
    %v647 = vadd.f32 %v645, %v646
    %v648 = vmul.f32 %v647, 0.015625
    %v649 = vmul.f32 %v597, %v597
    %v650 = vmul.f32 %v602, %v602
    %v651 = vmul.f32 %v607, %v607
    %v652 = vmul.f32 %v612, %v612
    %v653 = vmul.f32 %v617, %v617
    %v654 = vmul.f32 %v622, %v622
    %v655 = vmul.f32 %v627, %v627
    %v656 = vmul.f32 %v632, %v632
    %v657 = vadd.f32 %v649, %v650
    %v658 = vadd.f32 %v657, %v651
    %v659 = vadd.f32 %v658, %v652
    %v660 = vadd.f32 %v659, %v653
    %v661 = vadd.f32 %v660, %v654
    %v662 = vadd.f32 %v661, %v655
    %v663 = vadd.f32 %v662, %v656
    %v664 = vrot.slane %v663, 4
    %v665 = vadd.f32 %v663, %v664
    %v666 = vrot.slane %v665, 2
    %v667 = vadd.f32 %v665, %v666
    %v668 = vrot.slane %v667, 1
    %v669 = vadd.f32 %v667, %v668
    %v670 = vmul.f32 %v669, 0.015625
    %v671 = vmul.f32 %v648, %v648
    %v672 = vsub.f32 %v670, %v671
    %v673 = vmax.f32 %v672, 0.0
    %v674 = vadd.f32 %v673, 1e-05
    %v675 = vrsqrt.pop %v674
    %v676 = vmul.f32 %v226, %v675
    %v677 = vmul.f32 %v648, %v676
    %v679 = vrot.slane %v677, 7
    %v681 = vsub.f32 %v226, %v679
    %v682 = vlaneseq
    %v683 = vshrl.u32 %v682, 7
    %v684 = vsub.s32 4, %v683
    %v685 = vrot.slane %v676, %v684
    %v686 = vmul.f32 %v597, %v685
    %v687 = vmul.f32 %v602, %v685
    %v688 = vmul.f32 %v607, %v685
    %v689 = vmul.f32 %v612, %v685
    %v690 = vmul.f32 %v617, %v685
    %v691 = vmul.f32 %v622, %v685
    %v692 = vmul.f32 %v627, %v685
    %v693 = vmul.f32 %v632, %v685
    %v694 = vlaneseq
    %v695 = vshrl.u32 %v694, 7
    %v696 = vsub.s32 5, %v695
    %v697 = vrot.slane %v681, %v696
    %v698 = vadd.f32 %v686, %v697
    %v699 = vadd.f32 %v687, %v697
    %v700 = vadd.f32 %v688, %v697
    %v701 = vadd.f32 %v689, %v697
    %v702 = vadd.f32 %v690, %v697
    %v703 = vadd.f32 %v691, %v697
    %v704 = vadd.f32 %v692, %v697
    %v705 = vadd.f32 %v693, %v697
    %v706 = vmax.f32 %v698, 0.0
    %v707 = vmax.f32 %v699, 0.0
    %v708 = vmax.f32 %v700, 0.0
    %v709 = vmax.f32 %v701, 0.0
    %v710 = vmax.f32 %v702, 0.0
    %v711 = vmax.f32 %v703, 0.0
    %v712 = vmax.f32 %v704, 0.0
    %v713 = vmax.f32 %v705, 0.0
    %v714 = vld [vmem:[#allocation7] sm:$0xff]
    %v715 = vld [vmem:[#allocation7 + $0x8] sm:$0xff]
    %v716 = vld [vmem:[#allocation7 + $0x10] sm:$0xff]
    %v717 = vld [vmem:[#allocation7 + $0x18] sm:$0xff]
    %v718 = vld [vmem:[#allocation7 + $0x20] sm:$0xff]
    %v719 = vld [vmem:[#allocation7 + $0x28] sm:$0xff]
    %v720 = vld [vmem:[#allocation7 + $0x30] sm:$0xff]
    %v721 = vld [vmem:[#allocation7 + $0x38] sm:$0xff]
    %v722 = vld [vmem:[#allocation7 + $0x40] sm:$0xff]
    %v723 = vld [vmem:[#allocation7 + $0x48] sm:$0xff]
    %v724 = vld [vmem:[#allocation7 + $0x50] sm:$0xff]
    %v725 = vld [vmem:[#allocation7 + $0x58] sm:$0xff]
    %v726 = vld [vmem:[#allocation7 + $0x60] sm:$0xff]
    %v727 = vld [vmem:[#allocation7 + $0x68] sm:$0xff]
    %v728 = vld [vmem:[#allocation7 + $0x70] sm:$0xff]
    %v729 = vld [vmem:[#allocation7 + $0x78] sm:$0xff]
    %v730 = vlaneseq
    %v731 = vshrl.u32 %v730, 7
    %v732 = vsub.s32 6, %v731
    %v733 = vrot.slane %v226, %v732
    %734 = vmatprep.subr.mxu0 0.0
    %735 = vmatpush1.msra.mxu0 %v714
    %736 = vmatprep.subr.mxu0 0.0
    %737 = vmatpush1.msra.mxu0 %v715
    %738 = vmatprep.subr.mxu0 0.0
    %739 = vmatpush1.msra.mxu0 %v716
    %740 = vmatprep.subr.mxu0 0.0
    %741 = vmatpush1.msra.mxu0 %v717
    %742 = vmatprep.subr.mxu0 0.0
    %743 = vmatpush1.msra.mxu0 %v718
    %744 = vmatprep.subr.mxu0 0.0
    %745 = vmatpush1.msra.mxu0 %v719
    %746 = vmatprep.subr.mxu0 0.0
    %747 = vmatpush1.msra.mxu0 %v720
    %748 = vmatprep.subr.mxu0 0.0
    %749 = vmatpush1.msra.mxu0 %v721
    %750 = vmatprep.subr.mxu0 0.0
    %751 = vmatpush1.msra.mxu0 %v722
    %752 = vmatprep.subr.mxu0 0.0
    %753 = vmatpush1.msra.mxu0 %v723
    %754 = vmatprep.subr.mxu0 0.0
    %755 = vmatpush1.msra.mxu0 %v724
    %756 = vmatprep.subr.mxu0 0.0
    %757 = vmatpush1.msra.mxu0 %v725
    %758 = vmatprep.subr.mxu0 0.0
    %759 = vmatpush1.msra.mxu0 %v726
    %760 = vmatprep.subr.mxu0 0.0
    %761 = vmatpush1.msra.mxu0 %v727
    %762 = vmatprep.subr.mxu0 0.0
    %763 = vmatpush1.msra.mxu0 %v728
    %764 = vmatprep.subr.mxu0 0.0
    %765 = vmatpush1.msra.mxu0 %v729
    %766 = vmatprep.subr.mxu0 0.0
    %767 = vmatpush1.msra.mxu0 0.0
    %768 = vmatprep.subr.mxu0 0.0
    %769 = vmatpush1.msra.mxu0 0.0
    %770 = vmatprep.subr.mxu0 0.0
    %771 = vmatpush1.msra.mxu0 0.0
    %772 = vmatprep.subr.mxu0 0.0
    %773 = vmatpush1.msra.mxu0 0.0
    %774 = vmatprep.subr.mxu0 0.0
    %775 = vmatpush1.msra.mxu0 0.0
    %776 = vmatprep.subr.mxu0 0.0
    %777 = vmatpush1.msra.mxu0 0.0
    %778 = vmatprep.subr.mxu0 0.0
    %779 = vmatpush1.msra.mxu0 0.0
    %780 = vmatprep.subr.mxu0 0.0
    %781 = vmatpush1.msra.mxu0 0.0
    %782 = vmatprep.subr.mxu0 0.0
    %783 = vmatpush1.msra.mxu0 0.0
    %784 = vmatprep.subr.mxu0 0.0
    %785 = vmatpush1.msra.mxu0 0.0
    %786 = vmatprep.subr.mxu0 0.0
    %787 = vmatpush1.msra.mxu0 0.0
    %788 = vmatprep.subr.mxu0 0.0
    %789 = vmatpush1.msra.mxu0 0.0
    %790 = vmatprep.subr.mxu0 0.0
    %791 = vmatpush1.msra.mxu0 0.0
    %792 = vmatprep.subr.mxu0 0.0
    %793 = vmatpush1.msra.mxu0 0.0
    %794 = vmatprep.subr.mxu0 0.0
    %795 = vmatpush1.msra.mxu0 0.0
    %796 = vmatprep.subr.mxu0 0.0
    %797 = vmatpush1.msra.mxu0 0.0
    %798 = vmatprep.mubr.f32.mxu0 0.0
    %799 = vmatmul.mubr.f32.gmra.mrb[0].mxu0 %v706
    %v800 = vpop.f32.mrb[0].mxu0
    %v801 = vadd.f32 %v733, %v800
    %v802 = vpop.f32.mrb[0].mxu0
    %803 = vmatprep.mubr.f32.mxu0 0.0
    %804 = vmatmul.mubr.f32.gmra.mrb[0].mxu0 %v707
    %v805 = vpop.f32.mrb[0].mxu0
    %v806 = vadd.f32 %v733, %v805
    %v807 = vpop.f32.mrb[0].mxu0
    %808 = vmatprep.mubr.f32.mxu0 0.0
    %809 = vmatmul.mubr.f32.gmra.mrb[0].mxu0 %v708
    %v810 = vpop.f32.mrb[0].mxu0
    %v811 = vadd.f32 %v733, %v810
    %v812 = vpop.f32.mrb[0].mxu0
    %813 = vmatprep.mubr.f32.mxu0 0.0
    %814 = vmatmul.mubr.f32.gmra.mrb[0].mxu0 %v709
    %v815 = vpop.f32.mrb[0].mxu0
    %v816 = vadd.f32 %v733, %v815
    %v817 = vpop.f32.mrb[0].mxu0
    %818 = vmatprep.mubr.f32.mxu0 0.0
    %819 = vmatmul.mubr.f32.gmra.mrb[0].mxu0 %v710
    %v820 = vpop.f32.mrb[0].mxu0
    %v821 = vadd.f32 %v733, %v820
    %v822 = vpop.f32.mrb[0].mxu0
    %823 = vmatprep.mubr.f32.mxu0 0.0
    %824 = vmatmul.mubr.f32.gmra.mrb[0].mxu0 %v711
    %v825 = vpop.f32.mrb[0].mxu0
    %v826 = vadd.f32 %v733, %v825
    %v827 = vpop.f32.mrb[0].mxu0
    %828 = vmatprep.mubr.f32.mxu0 0.0
    %829 = vmatmul.mubr.f32.gmra.mrb[0].mxu0 %v712
    %v830 = vpop.f32.mrb[0].mxu0
    %v831 = vadd.f32 %v733, %v830
    %v832 = vpop.f32.mrb[0].mxu0
    %833 = vmatprep.mubr.f32.mxu0 0.0
    %834 = vmatmul.mubr.f32.gmra.mrb[0].mxu0 %v713
    %v835 = vpop.f32.mrb[0].mxu0
    %v836 = vadd.f32 %v733, %v835
    %v837 = vpop.f32.mrb[0].mxu0
    %838 = vdwg.mxu0
    %v839 = vlaneseq
    %v840 = vand.u32 %v839, 127
    %vm841 = vcmp.lt.s32.totalorder %v840, 4
    %v842 = vmul.f32 %v801, %v801
    %v843 = vmul.f32 %v806, %v806
    %v844 = vmul.f32 %v811, %v811
    %v845 = vmul.f32 %v816, %v816
    %v846 = vmul.f32 %v821, %v821
    %v847 = vmul.f32 %v826, %v826
    %v848 = vmul.f32 %v831, %v831
    %v849 = vmul.f32 %v836, %v836
    %v850 = vsel %vm841, %v842, 0.0
    %v851 = vsel %vm841, %v843, 0.0
    %v852 = vsel %vm841, %v844, 0.0
    %v853 = vsel %vm841, %v845, 0.0
    %v854 = vsel %vm841, %v846, 0.0
    %v855 = vsel %vm841, %v847, 0.0
    %v856 = vsel %vm841, %v848, 0.0
    %v857 = vsel %vm841, %v849, 0.0
    %858 = vadd.xlane.f32.xlu0 %v850
    %v859 = vpop.xlane.xlu0 %858
    %860 = vadd.xlane.f32.xlu0 %v851
    %v861 = vpop.xlane.xlu0 %860
    %862 = vadd.xlane.f32.xlu0 %v852
    %v863 = vpop.xlane.xlu0 %862
    %864 = vadd.xlane.f32.xlu0 %v853
    %v865 = vpop.xlane.xlu0 %864
    %866 = vadd.xlane.f32.xlu0 %v854
    %v867 = vpop.xlane.xlu0 %866
    %868 = vadd.xlane.f32.xlu0 %v855
    %v869 = vpop.xlane.xlu0 %868
    %870 = vadd.xlane.f32.xlu0 %v856
    %v871 = vpop.xlane.xlu0 %870
    %872 = vadd.xlane.f32.xlu0 %v857
    %v873 = vpop.xlane.xlu0 %872
    %v874 = vmax.f32 %v859, 1e-24
    %v875 = vmax.f32 %v861, 1e-24
    %v876 = vmax.f32 %v863, 1e-24
    %v877 = vmax.f32 %v865, 1e-24
    %v878 = vmax.f32 %v867, 1e-24
    %v879 = vmax.f32 %v869, 1e-24
    %v880 = vmax.f32 %v871, 1e-24
    %v881 = vmax.f32 %v873, 1e-24
    %v882 = vrsqrt.pop %v874
    %v883 = vrsqrt.pop %v875
    %v884 = vrsqrt.pop %v876
    %v885 = vrsqrt.pop %v877
    %v886 = vrsqrt.pop %v878
    %v887 = vrsqrt.pop %v879
    %v888 = vrsqrt.pop %v880
    %v889 = vrsqrt.pop %v881
    %v890 = vmul.f32 %v801, %v882
    %v891 = vmul.f32 %v806, %v883
    %v892 = vmul.f32 %v811, %v884
    %v893 = vmul.f32 %v816, %v885
    %v894 = vmul.f32 %v821, %v886
    %v895 = vmul.f32 %v826, %v887
    %v896 = vmul.f32 %v831, %v888
    %v897 = vmul.f32 %v836, %v889
    %v898 = vsub.f32 0.0, %v801
    %v899 = vsub.f32 0.0, %v806
    %v900 = vsub.f32 0.0, %v811
    %v901 = vsub.f32 0.0, %v816
    %v902 = vsub.f32 0.0, %v821
    %v903 = vsub.f32 0.0, %v826
    %v904 = vsub.f32 0.0, %v831
    %v905 = vsub.f32 0.0, %v836
    %v906 = vmul.f32 %v898, 1.442695
    %v907 = vpow.pop %v906
    %v908 = vmul.f32 %v899, 1.442695
    %v909 = vpow.pop %v908
    %v910 = vmul.f32 %v900, 1.442695
    %v911 = vpow.pop %v910
    %v912 = vmul.f32 %v901, 1.442695
    %v913 = vpow.pop %v912
    %v914 = vmul.f32 %v902, 1.442695
    %v915 = vpow.pop %v914
    %v916 = vmul.f32 %v903, 1.442695
    %v917 = vpow.pop %v916
    %v918 = vmul.f32 %v904, 1.442695
    %v919 = vpow.pop %v918
    %v920 = vmul.f32 %v905, 1.442695
    %v921 = vpow.pop %v920
    %v922 = vadd.f32 %v907, 1.0
    %v923 = vadd.f32 %v909, 1.0
    %v924 = vadd.f32 %v911, 1.0
    %v925 = vadd.f32 %v913, 1.0
    %v926 = vadd.f32 %v915, 1.0
    %v927 = vadd.f32 %v917, 1.0
    %v928 = vadd.f32 %v919, 1.0
    %v929 = vadd.f32 %v921, 1.0
    %v930 = vrcp.pop %v922
    %v931 = vrcp.pop %v923
    %v932 = vrcp.pop %v924
    %v933 = vrcp.pop %v925
    %v934 = vrcp.pop %v926
    %v935 = vrcp.pop %v927
    %v936 = vrcp.pop %v928
    %v937 = vrcp.pop %v929
    %v938 = vmul.f32 %v922, %v930
    %v939 = vmul.f32 %v923, %v931
    %v940 = vmul.f32 %v924, %v932
    %v941 = vmul.f32 %v925, %v933
    %v942 = vmul.f32 %v926, %v934
    %v943 = vmul.f32 %v927, %v935
    %v944 = vmul.f32 %v928, %v936
    %v945 = vmul.f32 %v929, %v937
    %v946 = vsub.f32 2.0, %v938
    %v947 = vsub.f32 2.0, %v939
    %v948 = vsub.f32 2.0, %v940
    %v949 = vsub.f32 2.0, %v941
    %v950 = vsub.f32 2.0, %v942
    %v951 = vsub.f32 2.0, %v943
    %v952 = vsub.f32 2.0, %v944
    %v953 = vsub.f32 2.0, %v945
    %v954 = vmul.f32 %v930, %v946
    %v955 = vmul.f32 %v931, %v947
    %v956 = vmul.f32 %v932, %v948
    %v957 = vmul.f32 %v933, %v949
    %v958 = vmul.f32 %v934, %v950
    %v959 = vmul.f32 %v935, %v951
    %v960 = vmul.f32 %v936, %v952
    %v961 = vmul.f32 %v937, %v953
    %v962 = vsel %vm841, %v890, %v954
    %v963 = vsel %vm841, %v891, %v955
    %v964 = vsel %vm841, %v892, %v956
    %v965 = vsel %vm841, %v893, %v957
    %v966 = vsel %vm841, %v894, %v958
    %v967 = vsel %vm841, %v895, %v959
    %v968 = vsel %vm841, %v896, %v960
    %v969 = vsel %vm841, %v897, %v961
    %970 = vst [vmem:[#allocation8] sm:$0xff] %v962
    %971 = vst [vmem:[#allocation8 + $0x8] sm:$0xff] %v963
    %972 = vst [vmem:[#allocation8 + $0x10] sm:$0xff] %v964
    %973 = vst [vmem:[#allocation8 + $0x18] sm:$0xff] %v965
    %974 = vst [vmem:[#allocation8 + $0x20] sm:$0xff] %v966
    %975 = vst [vmem:[#allocation8 + $0x28] sm:$0xff] %v967
    %976 = vst [vmem:[#allocation8 + $0x30] sm:$0xff] %v968
    %977 = vst [vmem:[#allocation8 + $0x38] sm:$0xff] %v969
    // Predicated region
    $region38: #{tpu_custom_call.1} parent=1 // pred_check
      _
    $region39: #{tpu_custom_call.1} parent=1 // pred_check_branch
      %979 = sbr.rel (0) target = $region41
    $region40: #{tpu_custom_call.1} parent=1 // pred_region
      %s981 = ssub.s32 1024, 1024
      %982 = vsyncadd [#allocation4], %s981
      %s983 = sshll.u32 [#allocation8], 4
      %s984 = int_to_ptr.vmem [resolvable:$true] %s983
      %989 = dma.vmem_to_hbm [thread:$0]  %s984, 1024, %s6, [#allocation4], 128, 128, 8
    $region41: #{tpu_custom_call.1} parent=1 // pred_fallthru
      _
    // Predicated region
    $region42: #{tpu_custom_call.1} parent=1 // pred_check
      _
    $region43: #{tpu_custom_call.1} parent=1 // pred_check_branch
      %991 = sbr.rel (0) target = $region45
    $region44: #{tpu_custom_call.1} parent=1 // pred_region
      %992 = dma.done [#allocation4], 1024
    $region45: #{tpu_custom_call.1} parent=1 // pred_fallthru
      _
    %993 = vsyncpa [#allocation3], 1
    %994 = vsyncpa [#allocation6], 1
    %995 = vsyncpa [#allocation4], 1

</llo_original>
